<compile_context>
chip_gen: v7x
topology: tpu7x:2x2x1
jax: 0.10.0
libtpu: 0.0.40
codegen_flags: <defaults>
</compile_context>

<pallas_src>
from functools import partial

import numpy as np
import jax
import jax.numpy as jnp
from jax.experimental import pallas as pl
from jax.experimental.pallas import tpu as pltpu


# Fixed, deterministic 3x3 Laplacian weights (matches the module's __init__).
# Only used by the pure-JAX reference; the kernel uses the separable form.
_LAP_WEIGHTS = np.array([[1.0, 1.0, 1.0],
                         [1.0, -8.0, 1.0],
                         [1.0, 1.0, 1.0]], dtype=np.float32)


def _round_up(n, m):
    return ((n + m - 1) // m) * m


# ---------------------------------------------------------------------------
# One-off probe of pltpu.roll's rotation direction (cached per process) so the
# wrap-column repair in the lane-dense kernel is correct regardless of the
# sign convention used by the installed Mosaic lowering.
# ---------------------------------------------------------------------------
_ROLL_IS_NUMPY = None


def _roll_matches_numpy():
    global _ROLL_IS_NUMPY
    if _ROLL_IS_NUMPY is None:
        def probe(x_ref, o_ref):
            o_ref[...] = pltpu.roll(x_ref[...], 1, axis=1)

        x = jnp.asarray(np.tile(np.arange(128, dtype=np.float32), (8, 1)))
        y = pl.pallas_call(
            probe, out_shape=jax.ShapeDtypeStruct((8, 128), jnp.float32))(x)
        y = np.asarray(jax.block_until_ready(y))
        # np.roll semantics: out[i] = in[(i - shift) % n]  =>  out[1] == 0.
        _ROLL_IS_NUMPY = bool(y[0, 1] == 0.0)
    return _ROLL_IS_NUMPY


# ---------------------------------------------------------------------------
# Kernels
# ---------------------------------------------------------------------------
def _sym_pair(v, shift, axis, size):
    """roll(+shift) + roll(-shift) along `axis` (direction-agnostic sum)."""
    s = shift % size
    if s == 0:
        return 2.0 * v
    return (pltpu.roll(v, s, axis=axis)
            + pltpu.roll(v, (size - s) % size, axis=axis))


def _laplacian_kernel_flat(x_ref, col_ref, o_ref, *, width, roll_is_numpy):
    """Lane-dense path: block is (TB, L) with L = H*W flattened row-major."""
    xf = x_ref[...].astype(jnp.float32)
    _, L = xf.shape
    W = width

    def nroll(v, k):
        # np.roll(v, k, axis=-1) semantics, independent of pltpu.roll's
        # convention; static shifts, identity rolls elided.
        s = k % L
        if not roll_is_numpy:
            s = (L - s) % L
        if s == 0:
            return v
        return pltpu.roll(v, s, axis=1)

    # 3-tap circular box-sum along H: +-W lane shifts.  The flattened axis'
    # circular wrap coincides exactly with the plane's H wrap -> no repair.
    t = xf + nroll(xf, W) + nroll(xf, -W)

    # 3-tap circular box-sum along W: +-1 lane shifts, repaired at the two
    # wrap columns of every row (w == 0 / w == W-1) with a roll that lands on
    # the in-row circular neighbour.
    if W == 1:
        u = 3.0 * t
    else:
        col = jnp.broadcast_to(col_ref[...], xf.shape)   # col[p] = p % W
        left = jnp.where(col == 0, nroll(t, 1 - W), nroll(t, 1))
        right = jnp.where(col == W - 1, nroll(t, W - 1), nroll(t, -1))
        u = t + left + right

    # box3x3(x) - 9*x  ==  [[1,1,1],[1,-8,1],[1,1,1]] * x  (circular padding).
    o_ref[...] = (u - 9.0 * xf).astype(o_ref.dtype)


def _laplacian_kernel_3d(x_ref, o_ref):
    """Fallback path: block is (TB, H, W); only symmetric rolls are used."""
    xf = x_ref[...].astype(jnp.float32)
    _, H, W = xf.shape
    t = xf + _sym_pair(xf, 1, 1, H)        # up + down neighbours (circular)
    u = t + _sym_pair(t, 1, 2, W)          # left + right neighbours (circular)
    o_ref[...] = (u - 9.0 * xf).astype(o_ref.dtype)


# ---------------------------------------------------------------------------
# Block sizing: padded-tile aware, generation aware, pipeline-depth aware.
# ---------------------------------------------------------------------------
def _vmem_capacity_bytes():
    try:
        return int(pltpu.get_tpu_info().vmem_capacity_bytes)
    except Exception:
        return 64 * 1024 * 1024            # conservative (v7x per-TensorCore)


def _choose_block_planes(num_planes, real_plane_bytes, padded_plane_vmem,
                         sublane_quantum):
    """Planes per grid step (TB) and an explicit scoped-VMEM limit (bytes)."""
    vmem_cap = _vmem_capacity_bytes()
    # ~1/4 of physical VMEM, capped at 24 MiB (v5e/v6e: 128 MiB, v7x: 64 MiB).
    budget = min(vmem_cap // 4, 24 * 1024 * 1024)
    tb_cap = max(1, budget // padded_plane_vmem)

    # Pipeline depth: keep >= 8 grid steps (>= 3-4 per TensorCore on a 2-TC
    # v7x) while each step still moves >= ~1 MiB of real data; tiny problems
    # collapse to as few steps as possible (per-step overhead ~0.35 us).
    if num_planes * real_plane_bytes < 8 * (1 << 20):
        tb = min(tb_cap, num_planes)
    else:
        tb = min(tb_cap, max(1, num_planes // 8))

    # (8,128) tiling rule on the plane axis (flattened layout only): the block
    # must span a multiple of `sublane_quantum` planes unless it spans all.
    if tb >= num_planes:
        tb = num_planes
    elif sublane_quantum > 1:
        if num_planes <= sublane_quantum:
            tb = num_planes
        else:
            tb = max(sublane_quantum, (tb // sublane_quantum) * sublane_quantum)

    footprint = _round_up(tb, sublane_quantum) * padded_plane_vmem
    vmem_limit = int(min(max(footprint + (8 << 20), 16 << 20),
                         vmem_cap - (16 << 20)))
    return int(tb), vmem_limit


# ---------------------------------------------------------------------------
# Wrapper
# ---------------------------------------------------------------------------
def laplacian_sharp(x, channels=5):
    """Depthwise circular 3x3 Laplacian conv of an NCHW tensor (zero bias)."""
    N, C, H, W = x.shape
    assert C == channels
    planes = N * C
    L = H * W
    itemsize = x.dtype.itemsize

    # Padded per-plane VMEM bytes: double-buffered input + double-buffered
    # output (BlockSpec pipeline) plus ~6 live f32 temporaries in the body.
    live_bytes = 2 * 2 * itemsize + 6 * 4
    flat_plane_vmem = _round_up(L, 128) * live_bytes

    # Lane-dense flattened path whenever W is not already a 128-multiple and
    # the minimum (8-plane) flat block fits a conservative 16 MiB.
    use_flat = (W % 128 != 0) and (8 * flat_plane_vmem <= 16 * 1024 * 1024)

    if use_flat:
        xf = x.reshape(planes, L)                     # free row-major reshape
        col = jnp.asarray((np.arange(L, dtype=np.int32) % W).reshape(1, L))
        tb, vmem_limit = _choose_block_planes(planes, L * itemsize,
                                              flat_plane_vmem, 8)
        kernel = partial(_laplacian_kernel_flat, width=W,
                         roll_is_numpy=_roll_matches_numpy())
        out = pl.pallas_call(
            kernel,
            out_shape=jax.ShapeDtypeStruct((planes, L), x.dtype),
            grid=(pl.cdiv(planes, tb),),
            in_specs=[pl.BlockSpec((tb, L), lambda i: (i, 0)),
                      pl.BlockSpec((1, L), lambda i: (0, 0))],
            out_specs=pl.BlockSpec((tb, L), lambda i: (i, 0)),
            compiler_params=pltpu.CompilerParams(
                dimension_semantics=("parallel",),
                vmem_limit_bytes=vmem_limit),
        )(xf, col)
    else:
        # Already lane-dense (W % 128 == 0) or the plane is too large for the
        # flattened block: keep (H, W) as the sublane/lane axes.
        # (Planes too big for VMEM even at TB=1 would need halo tiling of H.)
        plane3d_vmem = _round_up(H, 8) * _round_up(W, 128) * live_bytes
        xf = x.reshape(planes, H, W)
        tb, vmem_limit = _choose_block_planes(planes, L * itemsize,
                                              plane3d_vmem, 1)
        out = pl.pallas_call(
            _laplacian_kernel_3d,
            out_shape=jax.ShapeDtypeStruct((planes, H, W), x.dtype),
            grid=(pl.cdiv(planes, tb),),
            in_specs=[pl.BlockSpec((tb, H, W), lambda i: (i, 0, 0))],
            out_specs=pl.BlockSpec((tb, H, W), lambda i: (i, 0, 0)),
            compiler_params=pltpu.CompilerParams(
                dimension_semantics=("parallel",),
                vmem_limit_bytes=vmem_limit),
        )(xf)

    # Conv bias: the module's weight is the fixed frozen stencil and the bias
    # is deterministically zero for this operator -> dropped (no extra pass).
    return out.reshape(N, C, H, W)


# ---------------------------------------------------------------------------
# Pure-JAX reference (9 circularly shifted copies with the Laplacian weights)
# ---------------------------------------------------------------------------
def _reference(x):
    acc = jnp.zeros_like(x, dtype=jnp.float32)
    xf = x.astype(jnp.float32)
    for dh in (-1, 0, 1):
        for dw in (-1, 0, 1):
            wgt = float(_LAP_WEIGHTS[dh + 1, dw + 1])
            acc = acc + wgt * jnp.roll(jnp.roll(xf, -dh, axis=2), -dw, axis=3)
    return acc.astype(x.dtype)


if __name__ == "__main__":
    key = jax.random.PRNGKey(0)
    N, C, H, W = 2, 5, 16, 16
    x = jax.random.normal(key, (N, C, H, W), dtype=jnp.float32)

    y = jax.block_until_ready(laplacian_sharp(x, channels=C))

    y_ref = _reference(x)
    np.testing.assert_allclose(np.asarray(y), np.asarray(y_ref),
                               rtol=1e-5, atol=1e-5)

    print("KERNEL_OK")
</pallas_src>

<mosaic_0001>
module attributes {stable_mosaic.version = 11 : i64} {
  func.func @probe(%arg0: memref<8x128xf32, #tpu.memory_space<vmem>>, %arg1: memref<8x128xf32, #tpu.memory_space<vmem>>) attributes {dimension_semantics = [], scalar_prefetch = 0 : i64, scratch_operands = 0 : i64, tpu.core_type = #tpu.core_type<tc>} {
    %c0 = arith.constant 0 : index
    %c0_0 = arith.constant 0 : index
    %0 = vector.load %arg0[%c0, %c0_0] : memref<8x128xf32, #tpu.memory_space<vmem>>, vector<8x128xf32>
    %c1_i32 = arith.constant 1 : i32
    %1 = tpu.dynamic_rotate %0 by %c1_i32 dim 1 : vector<8x128xf32>, i32 -> vector<8x128xf32>
    %c0_1 = arith.constant 0 : index
    %c0_2 = arith.constant 0 : index
    %2 = vector.load %arg1[%c0_1, %c0_2] : memref<8x128xf32, #tpu.memory_space<vmem>>, vector<8x128xf32>
    tpu.vector_store %arg1[%c0_1, %c0_2], %1 {strides = array<i32>} : memref<8x128xf32, #tpu.memory_space<vmem>>, vector<8x128xf32>,
    return
  }
}

</mosaic_0001>

<llo_original>
// kernel: tpu_custom_call.1
$region0: #{tpu_custom_call.1}
  #allocation0 [shape = 'u32[]', space=smem, size = 0x4, offset = 0x4, fixed_abs, tag = 'smem constant byte address 0x4 - core index']
  #allocation1 [shape = 'u32[144,128]{1,0:T(1,128)}', space=vmem, size = 0x12000, scoped, tag = 'internal scratch']
  %s0 = inlined_call_operand.hbm [shape: f32[8,128], index: 0, kind: input, shape index: {}]
  %s1 = inlined_call_operand.hbm [shape: f32[8,128], index: 1, kind: output, shape index: {}]
  %s2 = sld [smem:[#allocation0]]
  $region18: #{tpu_custom_call.1} parent=0
    _
  %s4 = ssub.s32 1, %s2
  %s5 = scalar_select 0, %s4, %s2
  $region1: #{tpu_custom_call.1} parent=0
    #allocation2 [shape = 'u8[4096]{0}', space=vmem, size = 0x1000, scoped, tag = 'input window, operand 0, single buffered']
    #allocation3 [shape = 's32[1]{0}', space=sflag, size = 0x4, scoped, tag = 'scoped memory for tpu_custom_call.1']
    #allocation4 [shape = 's32[1]{0}', space=sflag, size = 0x4, scoped, tag = 'scoped memory for tpu_custom_call.1']
    #allocation5 [shape = 'u8[4096]{0}', space=vmem, size = 0x1000, scoped, tag = 'output window, operand 0, single buffered']
    %6 = vsyncpa [#allocation3], 0
    %7 = vsyncpa [#allocation4], 0
    // Predicated region
    $region2: #{tpu_custom_call.1} parent=1 // pred_check
      _
    $region3: #{tpu_custom_call.1} parent=1 // pred_check_branch
      %9 = sbr.rel (0) target = $region5
    $region4: #{tpu_custom_call.1} parent=1 // pred_region
      %s11 = ssub.s32 128, 128
      %12 = vsyncadd [#allocation3], %s11
      %s14 = sshll.u32 [#allocation2], 4
      %s15 = int_to_ptr.vmem [resolvable:$true] %s14
      %17 = dma.hbm_to_vmem [thread:$0]  %s0, 128, %s15, [#allocation3]
    $region5: #{tpu_custom_call.1} parent=1 // pred_fallthru
      _
    // Predicated region
    $region6: #{tpu_custom_call.1} parent=1 // pred_check
      _
    $region7: #{tpu_custom_call.1} parent=1 // pred_check_branch
      %19 = sbr.rel (0) target = $region9
    $region8: #{tpu_custom_call.1} parent=1 // pred_region
      %20 = dma.done [#allocation3], 128
    $region9: #{tpu_custom_call.1} parent=1 // pred_fallthru
      _
    %v21 = vld [vmem:[#allocation2] sm:$0xff]
    %22 = vrot.lane.b32.xlu0 %v21, 1
    %v23 = vpop.permute.xlu0 %22
    %24 = vst [vmem:[#allocation5] sm:$0xff] %v23
    // Predicated region
    $region10: #{tpu_custom_call.1} parent=1 // pred_check
      _
    $region11: #{tpu_custom_call.1} parent=1 // pred_check_branch
      %26 = sbr.rel (0) target = $region13
    $region12: #{tpu_custom_call.1} parent=1 // pred_region
      %s28 = ssub.s32 128, 128
      %29 = vsyncadd [#allocation4], %s28
      %s31 = sshll.u32 [#allocation5], 4
      %s32 = int_to_ptr.vmem [resolvable:$true] %s31
      %34 = dma.vmem_to_hbm [thread:$0]  %s32, 128, %s1, [#allocation4]
    $region13: #{tpu_custom_call.1} parent=1 // pred_fallthru
      _
    // Predicated region
    $region14: #{tpu_custom_call.1} parent=1 // pred_check
      _
    $region15: #{tpu_custom_call.1} parent=1 // pred_check_branch
      %36 = sbr.rel (0) target = $region17
    $region16: #{tpu_custom_call.1} parent=1 // pred_region
      %37 = dma.done [#allocation4], 128
    $region17: #{tpu_custom_call.1} parent=1 // pred_fallthru
      _
    %38 = vsyncpa [#allocation3], 1
    %39 = vsyncpa [#allocation4], 1

</llo_original>
